<compile_context>
chip_gen: v5e
topology: v5e:2x2
jax: 0.10.0
libtpu: 0.0.40
codegen_flags: <defaults>
</compile_context>

<pallas_src>
import functools
import math

import jax
import jax.numpy as jnp
from jax import lax
from jax.experimental import pallas as pl
from jax.experimental.pallas import tpu as pltpu


def _round_up(n, m):
    return (n + m - 1) // m * m


def _vmem_limit_bytes():
    """Generation-aware scoped-VMEM limit (~3/4 of physical VMEM, capped at 96 MiB)."""
    cap = 64 * 1024 * 1024
    try:
        info = pltpu.get_tpu_info()
        cap = int(getattr(info, "vmem_capacity_bytes", cap) or cap)
    except Exception:
        pass
    return int(min(cap * 3 // 4, 96 * 1024 * 1024))


_VMEM_LIMIT = _vmem_limit_bytes()


def _pick_row_tile(rows, bytes_per_row):
    """Largest row tile (multiple of 256 when big, else of 8) fitting the VMEM budget."""
    budget = max(_VMEM_LIMIT // 3, 1 << 20)
    t = max(8, budget // max(bytes_per_row, 1))
    t = min(t, 1024, _round_up(rows, 8))
    t = (t // 256) * 256 if t >= 256 else max(8, (t // 8) * 8)
    # keep at least 2 row tiles when possible so v7x's second TensorCore gets work
    if t >= rows and rows > 8:
        t = max(8, ((rows + 1) // 2 + 7) // 8 * 8)
    return t


def _compiler_params():
    return pltpu.CompilerParams(
        dimension_semantics=("parallel",),
        vmem_limit_bytes=_VMEM_LIMIT,
    )


# ---------------------------------------------------------------------------
# Kernel A: LayerNorm_1 fused with the packed Q/K/V projection
# ---------------------------------------------------------------------------
def _ln_qkv_kernel(x_ref, a_ref, b_ref, w_ref, bias_ref, o_ref, *, eps):
    x = x_ref[...].astype(jnp.float32)                      # (tm, d)
    f = x.shape[-1]
    mean = jnp.mean(x, axis=-1, keepdims=True)
    xc = x - mean                                           # two-pass: no cancellation
    var = jnp.sum(xc * xc, axis=-1, keepdims=True) * (1.0 / (f - 1))   # ddof=1 (torch .std)
    h = a_ref[...] * xc / (jnp.sqrt(var) + eps) + b_ref[...]
    y = jnp.dot(h.astype(jnp.bfloat16), w_ref[...],         # bf16 x bf16 -> f32 acc
                preferred_element_type=jnp.float32) + bias_ref[...]
    o_ref[...] = y.astype(o_ref.dtype)


def _ln_qkv(x2d, ln_a, ln_b, w_bf16, bias, *, eps):
    rows, d = x2d.shape
    n_out = w_bf16.shape[1]
    tm = _pick_row_tile(rows, 2 * (4 * d + 4 * n_out) + 8 * d)
    return pl.pallas_call(
        functools.partial(_ln_qkv_kernel, eps=eps),
        out_shape=jax.ShapeDtypeStruct((rows, n_out), jnp.float32),
        grid_spec=pltpu.PrefetchScalarGridSpec(
            num_scalar_prefetch=0,
            grid=(pl.cdiv(rows, tm),),
            in_specs=[
                pl.BlockSpec((tm, d), lambda i: (i, 0)),
                pl.BlockSpec((1, d), lambda i: (0, 0)),
                pl.BlockSpec((1, d), lambda i: (0, 0)),
                pl.BlockSpec((d, n_out), lambda i: (0, 0)),
                pl.BlockSpec((1, n_out), lambda i: (0, 0)),
            ],
            out_specs=pl.BlockSpec((tm, n_out), lambda i: (i, 0)),
        ),
        compiler_params=_compiler_params(),
    )(x2d, ln_a.reshape(1, d), ln_b.reshape(1, d), w_bf16, bias.reshape(1, n_out))


# ---------------------------------------------------------------------------
# Kernel B: multi-head self-attention (all heads per batch element per step)
# ---------------------------------------------------------------------------
def _attention_kernel(qkv_ref, bias_ref, o_ref, *, n_heads, d_k, scale):
    # TODO(synk): for long sequences replace with a flash-style KV-tiled
    # online-softmax kernel; full (S, S) scores per head are fine at small S.
    bias = bias_ref[...]                                    # (1, S): 0 keep, -1e9 masked
    d = n_heads * d_k
    outs = []
    for h in range(n_heads):                                # static unroll over heads
        q = qkv_ref[:, h * d_k:(h + 1) * d_k].astype(jnp.bfloat16)          # (S, d_k)
        k = qkv_ref[:, d + h * d_k:d + (h + 1) * d_k].astype(jnp.bfloat16)
        v = qkv_ref[:, 2 * d + h * d_k:2 * d + (h + 1) * d_k].astype(jnp.bfloat16)
        s = lax.dot_general(q, k, (((1,), (1,)), ((), ())),
                            preferred_element_type=jnp.float32) * scale     # (S, S)
        s = s + bias                                        # == masked_fill(mask==0,-1e9)
        s = s - jnp.max(s, axis=-1, keepdims=True)
        e = jnp.exp(s)
        p = e / jnp.sum(e, axis=-1, keepdims=True)
        outs.append(jnp.dot(p.astype(jnp.bfloat16), v,
                            preferred_element_type=jnp.float32))            # (S, d_k)
    o_ref[...] = jnp.concatenate(outs, axis=-1).astype(o_ref.dtype)         # (S, d)


def _attention(qkv, mask, B, S, n_heads):
    rows, three_d = qkv.shape
    d = three_d // 3
    d_k = d // n_heads
    scale = 1.0 / math.sqrt(d_k)
    # additive mask bias, precomputed once (tiny): 0 where attend, -1e9 where masked
    bias = ((mask.astype(jnp.float32) - 1.0) * 1e9).reshape(B, 1, S)
    return pl.pallas_call(
        functools.partial(_attention_kernel, n_heads=n_heads, d_k=d_k, scale=scale),
        out_shape=jax.ShapeDtypeStruct((rows, d), jnp.float32),
        grid_spec=pltpu.PrefetchScalarGridSpec(
            num_scalar_prefetch=0,
            grid=(B,),
            in_specs=[
                pl.BlockSpec((S, three_d), lambda bb: (bb, 0)),   # rows of batch bb
                pl.BlockSpec((None, 1, S), lambda bb: (bb, 0, 0)),
            ],
            out_specs=pl.BlockSpec((S, d), lambda bb: (bb, 0)),
        ),
        compiler_params=_compiler_params(),
    )(qkv, bias)


# ---------------------------------------------------------------------------
# Kernel C: out-proj + residual + LayerNorm_2 + FFN (relu) + residual
# ---------------------------------------------------------------------------
def _proj_ln_ffn_kernel(attn_ref, x_ref, wo_ref, bo_ref, a2_ref, b2_ref,
                        w1_ref, b1_ref, w2_ref, bff2_ref, o_ref, *, eps):
    # residual 1: x2 = x + attn @ Wo + bo
    x2 = x_ref[...].astype(jnp.float32) + (
        jnp.dot(attn_ref[...].astype(jnp.bfloat16), wo_ref[...],
                preferred_element_type=jnp.float32) + bo_ref[...])
    # LayerNorm_2 (two-pass, unbiased std, eps on std)
    f = x2.shape[-1]
    mean = jnp.mean(x2, axis=-1, keepdims=True)
    xc = x2 - mean
    var = jnp.sum(xc * xc, axis=-1, keepdims=True) * (1.0 / (f - 1))
    h = a2_ref[...] * xc / (jnp.sqrt(var) + eps) + b2_ref[...]
    # feed-forward with fused residual 2 (the (tm, d_ff) intermediate stays on-chip)
    u = jnp.dot(h.astype(jnp.bfloat16), w1_ref[...],
                preferred_element_type=jnp.float32) + b1_ref[...]
    u = jnp.maximum(u, 0.0)
    y = jnp.dot(u.astype(jnp.bfloat16), w2_ref[...],
                preferred_element_type=jnp.float32) + bff2_ref[...]
    o_ref[...] = (x2 + y).astype(o_ref.dtype)


def _proj_ln_ffn(attn2d, x2d, wo, bo, ln_a, ln_b, w1, b1, w2, b2, *, eps):
    rows, d = x2d.shape
    d_ff = w1.shape[1]
    tm = _pick_row_tile(rows, 2 * (4 * d + 4 * d + 4 * d) + 4 * d_ff + 12 * d)
    return pl.pallas_call(
        functools.partial(_proj_ln_ffn_kernel, eps=eps),
        out_shape=jax.ShapeDtypeStruct((rows, d), x2d.dtype),
        grid_spec=pltpu.PrefetchScalarGridSpec(
            num_scalar_prefetch=0,
            grid=(pl.cdiv(rows, tm),),
            in_specs=[
                pl.BlockSpec((tm, d), lambda i: (i, 0)),      # attention output
                pl.BlockSpec((tm, d), lambda i: (i, 0)),      # x (residual)
                pl.BlockSpec((d, d), lambda i: (0, 0)),       # W_o (bf16, resident)
                pl.BlockSpec((1, d), lambda i: (0, 0)),       # b_o
                pl.BlockSpec((1, d), lambda i: (0, 0)),       # ln2 a_2
                pl.BlockSpec((1, d), lambda i: (0, 0)),       # ln2 b_2
                pl.BlockSpec((d, d_ff), lambda i: (0, 0)),    # W_1 (bf16, resident)
                pl.BlockSpec((1, d_ff), lambda i: (0, 0)),    # b_1
                pl.BlockSpec((d_ff, d), lambda i: (0, 0)),    # W_2 (bf16, resident)
                pl.BlockSpec((1, d), lambda i: (0, 0)),       # b_2
            ],
            out_specs=pl.BlockSpec((tm, d), lambda i: (i, 0)),
        ),
        compiler_params=_compiler_params(),
    )(attn2d, x2d, wo, bo.reshape(1, d), ln_a.reshape(1, d), ln_b.reshape(1, d),
      w1, b1.reshape(1, d_ff), w2, b2.reshape(1, d))


# ---------------------------------------------------------------------------
# EncoderLayer forward
# ---------------------------------------------------------------------------
def encoder_layer_forward(x, mask, params, *, n_heads, eps=1e-6):
    """x: (B, S, d_model) f32; mask: (B, S) with 1 = attend, 0 = masked."""
    # TODO(synk): training-mode dropout (pltpu.prng_*) not implemented; this is the
    # eval-mode forward (dropout == identity), matching the module's inference path.
    B, S, d = x.shape
    rows = B * S
    x2d = x.reshape(rows, d)

    # Weights go through the MXU in bf16 (f32 accumulation); cast once up front.
    w_qkv = params["w_qkv"].astype(jnp.bfloat16)
    w_o = params["w_o"].astype(jnp.bfloat16)
    w_1 = params["w_1"].astype(jnp.bfloat16)
    w_2 = params["w_2"].astype(jnp.bfloat16)

    # Kernel A: LN1 fused with the packed Q/K/V projection.
    qkv = _ln_qkv(x2d, params["ln1_a"], params["ln1_b"], w_qkv, params["b_qkv"], eps=eps)

    # Kernel B: multi-head self-attention, all heads per batch element per step.
    attn = _attention(qkv, mask, B, S, n_heads)              # (rows, d), heads concatenated

    # Kernel C: out-proj + residual, LN2, FFN + residual — one row-wise pass.
    out = _proj_ln_ffn(attn, x2d, w_o, params["b_o"], params["ln2_a"], params["ln2_b"],
                       w_1, params["b_1"], w_2, params["b_2"], eps=eps)
    return out.reshape(B, S, d)


# ---------------------------------------------------------------------------
# Pure-JAX reference (mirrors the PyTorch module exactly, eval mode, f32)
# ---------------------------------------------------------------------------
def _ref_layer_norm(x, a, b, eps):
    mean = jnp.mean(x, axis=-1, keepdims=True)
    var = jnp.sum((x - mean) ** 2, axis=-1, keepdims=True) / (x.shape[-1] - 1)
    return a * (x - mean) / (jnp.sqrt(var) + eps) + b


def _ref_encoder_layer(x, mask, params, *, n_heads, eps):
    B, S, d = x.shape
    d_k = d // n_heads
    h1 = _ref_layer_norm(x, params["ln1_a"], params["ln1_b"], eps)
    qkv = h1 @ params["w_qkv"] + params["b_qkv"]
    q, k, v = jnp.split(qkv, 3, axis=-1)

    def split_heads(t):
        return t.reshape(B, S, n_heads, d_k).transpose(0, 2, 1, 3)

    q, k, v = split_heads(q), split_heads(k), split_heads(v)
    scores = jnp.einsum("bhqd,bhkd->bhqk", q, k) / math.sqrt(d_k)
    scores = jnp.where(mask[:, None, None, :] == 0.0, -1e9, scores)
    p = jax.nn.softmax(scores, axis=-1)
    attn = jnp.einsum("bhqk,bhkd->bhqd", p, v)
    attn = attn.transpose(0, 2, 1, 3).reshape(B, S, d)
    x2 = x + (attn @ params["w_o"] + params["b_o"])
    h2 = _ref_layer_norm(x2, params["ln2_a"], params["ln2_b"], eps)
    f = jnp.maximum(h2 @ params["w_1"] + params["b_1"], 0.0) @ params["w_2"] + params["b_2"]
    return x2 + f


# ---------------------------------------------------------------------------
if __name__ == "__main__":
    B, S, d_model, n_heads, d_ff = 2, 8, 128, 4, 512   # lane-dense feature dims
    eps = 1e-6

    key = jax.random.PRNGKey(0)
    k_x, k_qkv, k_o, k_1, k_2, k_b = jax.random.split(key, 6)

    x = jax.random.normal(k_x, (B, S, d_model), dtype=jnp.float32)
    mask = jnp.ones((B, S), dtype=jnp.float32).at[1, -2:].set(0.0)  # mask 2 keys in batch 1

    def init_w(kk, fan_in, fan_out):
        return jax.random.normal(kk, (fan_in, fan_out), jnp.float32) / math.sqrt(fan_in)

    kq, kk_, kv = jax.random.split(k_qkv, 3)
    kb = jax.random.split(k_b, 4)
    params = dict(
        ln1_a=jnp.ones((d_model,), jnp.float32), ln1_b=jnp.zeros((d_model,), jnp.float32),
        ln2_a=jnp.ones((d_model,), jnp.float32), ln2_b=jnp.zeros((d_model,), jnp.float32),
        w_qkv=jnp.concatenate([init_w(kq, d_model, d_model),
                               init_w(kk_, d_model, d_model),
                               init_w(kv, d_model, d_model)], axis=1),
        b_qkv=0.02 * jax.random.normal(kb[0], (3 * d_model,), jnp.float32),
        w_o=init_w(k_o, d_model, d_model),
        b_o=0.02 * jax.random.normal(kb[1], (d_model,), jnp.float32),
        w_1=init_w(k_1, d_model, d_ff),
        b_1=0.02 * jax.random.normal(kb[2], (d_ff,), jnp.float32),
        w_2=init_w(k_2, d_ff, d_model),
        b_2=0.02 * jax.random.normal(kb[3], (d_model,), jnp.float32),
    )

    out = encoder_layer_forward(x, mask, params, n_heads=n_heads, eps=eps)
    out = jax.block_until_ready(out)

    ref = _ref_encoder_layer(x, mask, params, n_heads=n_heads, eps=eps)
    assert out.shape == ref.shape
    # tolerance covers bf16 MXU operands (f32 accumulation) vs. the f32 reference
    assert bool(jnp.allclose(out, ref, atol=2e-2, rtol=2e-2)), "mismatch vs reference"

    print("KERNEL_OK")
</pallas_src>

<mosaic_0001>
module attributes {stable_mosaic.version = 11 : i64} {
  func.func @_ln_qkv_kernel(%arg0: i32, %arg1: memref<8x128xf32, #tpu.memory_space<vmem>>, %arg2: memref<1x128xf32, #tpu.memory_space<vmem>>, %arg3: memref<1x128xf32, #tpu.memory_space<vmem>>, %arg4: memref<128x384xbf16, #tpu.memory_space<vmem>>, %arg5: memref<1x384xf32, #tpu.memory_space<vmem>>, %arg6: memref<8x384xf32, #tpu.memory_space<vmem>>) attributes {dimension_semantics = [#tpu.dimension_semantics<parallel>], iteration_bounds = array<i64: 2>, scalar_prefetch = 0 : i64, scratch_operands = 0 : i64, tpu.core_type = #tpu.core_type<tc>, window_params = [{transform_indices = @transform_0, window_bounds = array<i64: 8, 128>}, {pipeline_mode = #tpu.pipeline_mode<synchronous>, transform_indices = @transform_1, window_bounds = array<i64: 1, 128>}, {pipeline_mode = #tpu.pipeline_mode<synchronous>, transform_indices = @transform_2, window_bounds = array<i64: 1, 128>}, {pipeline_mode = #tpu.pipeline_mode<synchronous>, transform_indices = @transform_3, window_bounds = array<i64: 128, 384>}, {pipeline_mode = #tpu.pipeline_mode<synchronous>, transform_indices = @transform_4, window_bounds = array<i64: 1, 384>}, {transform_indices = @transform_5, window_bounds = array<i64: 8, 384>}]} {
    %c0 = arith.constant 0 : index
    %c0_0 = arith.constant 0 : index
    %0 = vector.load %arg1[%c0, %c0_0] : memref<8x128xf32, #tpu.memory_space<vmem>>, vector<8x128xf32>
    %cst = arith.constant dense<0.000000e+00> : vector<8xf32>
    %1 = vector.multi_reduction <add>, %0, %cst [1] : vector<8x128xf32> to vector<8xf32>
    %2 = vector.shape_cast %1 : vector<8xf32> to vector<8x1xf32>
    %cst_1 = arith.constant 1.280000e+02 : f32
    %3 = vector.broadcast %cst_1 : f32 to vector<8x1xf32>
    %4 = arith.divf %2, %3 : vector<8x1xf32>
    %5 = vector.broadcast %4 : vector<8x1xf32> to vector<8x128xf32>
    %6 = arith.subf %0, %5 : vector<8x128xf32>
    %7 = arith.mulf %6, %6 : vector<8x128xf32>
    %cst_2 = arith.constant dense<0.000000e+00> : vector<8xf32>
    %8 = vector.multi_reduction <add>, %7, %cst_2 [1] : vector<8x128xf32> to vector<8xf32>
    %9 = vector.shape_cast %8 : vector<8xf32> to vector<8x1xf32>
    %cst_3 = arith.constant 0.00787401571 : f32
    %10 = vector.broadcast %cst_3 : f32 to vector<8x1xf32>
    %11 = arith.mulf %9, %10 : vector<8x1xf32>
    %c0_4 = arith.constant 0 : index
    %c0_5 = arith.constant 0 : index
    %12 = vector.load %arg2[%c0_4, %c0_5] : memref<1x128xf32, #tpu.memory_space<vmem>>, vector<1x128xf32>
    %13 = vector.broadcast %12 : vector<1x128xf32> to vector<8x128xf32>
    %14 = arith.mulf %13, %6 : vector<8x128xf32>
    %15 = math.sqrt %11 : vector<8x1xf32>
    %cst_6 = arith.constant 9.99999997E-7 : f32
    %16 = vector.broadcast %cst_6 : f32 to vector<8x1xf32>
    %17 = arith.addf %15, %16 : vector<8x1xf32>
    %18 = vector.broadcast %17 : vector<8x1xf32> to vector<8x128xf32>
    %19 = arith.divf %14, %18 : vector<8x128xf32>
    %c0_7 = arith.constant 0 : index
    %c0_8 = arith.constant 0 : index
    %20 = vector.load %arg3[%c0_7, %c0_8] : memref<1x128xf32, #tpu.memory_space<vmem>>, vector<1x128xf32>
    %21 = vector.broadcast %20 : vector<1x128xf32> to vector<8x128xf32>
    %22 = arith.addf %19, %21 : vector<8x128xf32>
    %23 = arith.truncf %22 : vector<8x128xf32> to vector<8x128xbf16>
    %c0_9 = arith.constant 0 : index
    %c0_10 = arith.constant 0 : index
    %24 = vector.load %arg4[%c0_9, %c0_10] : memref<128x384xbf16, #tpu.memory_space<vmem>>, vector<128x384xbf16>
    %cst_11 = arith.constant dense<0.000000e+00> : vector<8x384xf32>
    %25 = tpu.matmul %23, %24, %cst_11 {dimension_numbers = #tpu.dot_dimension_numbers<[1], [0], [0], [1], [0, 0, 1, 1], [], []>} : vector<8x128xbf16>, vector<128x384xbf16>, vector<8x384xf32> -> vector<8x384xf32>
    %c0_12 = arith.constant 0 : index
    %c0_13 = arith.constant 0 : index
    %26 = vector.load %arg5[%c0_12, %c0_13] : memref<1x384xf32, #tpu.memory_space<vmem>>, vector<1x384xf32>
    %27 = vector.broadcast %26 : vector<1x384xf32> to vector<8x384xf32>
    %28 = arith.addf %25, %27 : vector<8x384xf32>
    %c0_14 = arith.constant 0 : index
    %c0_15 = arith.constant 0 : index
    %29 = vector.load %arg6[%c0_14, %c0_15] : memref<8x384xf32, #tpu.memory_space<vmem>>, vector<8x384xf32>
    tpu.vector_store %arg6[%c0_14, %c0_15], %28 {strides = array<i32>} : memref<8x384xf32, #tpu.memory_space<vmem>>, vector<8x384xf32>,
    return
  }
  func.func @transform_0(%arg0: i32) -> (i32, i32) {
    %c0_i32 = arith.constant 0 : i32
    %c0_i32_0 = arith.constant 0 : i32
    return %arg0, %c0_i32 : i32, i32
  }
  func.func @transform_1(%arg0: i32) -> (i32, i32) {
    %c0_i32 = arith.constant 0 : i32
    %c0_i32_0 = arith.constant 0 : i32
    %c0_i32_1 = arith.constant 0 : i32
    return %c0_i32, %c0_i32_0 : i32, i32
  }
  func.func @transform_2(%arg0: i32) -> (i32, i32) {
    %c0_i32 = arith.constant 0 : i32
    %c0_i32_0 = arith.constant 0 : i32
    %c0_i32_1 = arith.constant 0 : i32
    return %c0_i32, %c0_i32_0 : i32, i32
  }
  func.func @transform_3(%arg0: i32) -> (i32, i32) {
    %c0_i32 = arith.constant 0 : i32
    %c0_i32_0 = arith.constant 0 : i32
    %c0_i32_1 = arith.constant 0 : i32
    return %c0_i32, %c0_i32_0 : i32, i32
  }
  func.func @transform_4(%arg0: i32) -> (i32, i32) {
    %c0_i32 = arith.constant 0 : i32
    %c0_i32_0 = arith.constant 0 : i32
    %c0_i32_1 = arith.constant 0 : i32
    return %c0_i32, %c0_i32_0 : i32, i32
  }
  func.func @transform_5(%arg0: i32) -> (i32, i32) {
    %c0_i32 = arith.constant 0 : i32
    %c0_i32_0 = arith.constant 0 : i32
    return %arg0, %c0_i32 : i32, i32
  }
}

</mosaic_0001>

<llo_original>
// kernel: tpu_custom_call.1
$region0: #{tpu_custom_call.1}
  #allocation0 [shape = 'u32[]', space=smem, size = 0x4, offset = 0x4, fixed_abs, tag = 'smem constant byte address 0x4 - core index']
  #allocation1 [shape = 'u32[72,128]{1,0:T(1,128)}', space=vmem, size = 0x9000, scoped, tag = 'internal scratch']
  %s0 = inlined_call_operand.hbm [shape: f32[16,128], index: 0, kind: input, shape index: {}]
  %s1 = inlined_call_operand.hbm [shape: f32[1,128], index: 1, kind: input, shape index: {}]
  %s2 = inlined_call_operand.hbm [shape: f32[1,128], index: 2, kind: input, shape index: {}]
  %s3 = inlined_call_operand.hbm [shape: bf16[128,384], index: 3, kind: input, shape index: {}]
  %s4 = inlined_call_operand.vmem [shape: f32[1,384], index: 4, kind: input, shape index: {}]
  %s5 = inlined_call_operand.hbm [shape: f32[16,384], index: 5, kind: output, shape index: {}]
  %s6 = sld [smem:[#allocation0]]
  $region69: #{tpu_custom_call.1} parent=0
    _
  %s8 = ssub.s32 1, %s6
  %s9 = scalar_select 0, %s8, %s6
  $region1: #{tpu_custom_call.1} parent=0
    #allocation2 [shape = 'u8[8192]{0}', space=vmem, size = 0x2000, scoped, tag = 'input window, operand 0']
    #allocation3 [shape = 's32[2]{0}', space=sflag, size = 0x8, scoped, tag = 'scoped memory for tpu_custom_call.1']
    #allocation4 [shape = 's32[2]{0}', space=sflag, size = 0x8, scoped, tag = 'scoped memory for tpu_custom_call.1']
    #allocation5 [shape = 'u8[512]{0}', space=vmem, size = 0x400, scoped, tag = 'input window, operand 1, single buffered']
    #allocation6 [shape = 's32[1]{0}', space=sflag, size = 0x4, scoped, tag = 'scoped memory for tpu_custom_call.1']
    #allocation7 [shape = 'u8[512]{0}', space=vmem, size = 0x400, scoped, tag = 'input window, operand 2, single buffered']
    #allocation8 [shape = 'u8[98304]{0}', space=vmem, size = 0x18000, scoped, tag = 'input window, operand 3, single buffered']
    #allocation9 [shape = 's32[1]{0}', space=sflag, size = 0x4, scoped, tag = 'scoped memory for tpu_custom_call.1']
    #allocation10 [shape = 'u8[24576]{0}', space=vmem, size = 0x6000, scoped, tag = 'output window, operand 0']
    %10 = vsyncpa [#allocation3], 0
    %s11 = scalar_lea.sflag [#allocation3], 1
    %12 = vsyncpa %s11, 0
    %13 = vsyncpa [#allocation6], 0
    %14 = vsyncpa [#allocation9], 0
    %15 = vsyncpa [#allocation4], 0
    %s16 = scalar_lea.sflag [#allocation4], 1
    %17 = vsyncpa %s16, 0
    loop: start=0, step=1, limit=4
    $region2: #{tpu_custom_call.1} parent=1 // loop_pre_header
      _
    $region3: #{tpu_custom_call.1} parent=1 // loop_header
      %s19 = sphi 0, %s23
      %p20 = scmp.ge.s32.totalorder %s19, 4
      %s29 = sphi 0, %s31
      %s32 = sphi 0, %s29
      %s33 = sphi 0, %s32
      %s49 = sphi 0, %s33
      %s53 = sphi 0, %s53
      %s55 = sphi 0, %s53
      %s56 = sphi 0, %s55
      %s70 = sphi 0, %s56
      %s74 = sphi 0, %s74
      %s76 = sphi 0, %s74
      %s77 = sphi 0, %s76
      %s91 = sphi 0, %s77
      %s95 = sphi 0, %s95
      %s97 = sphi 0, %s95
      %s98 = sphi 0, %s97
      %s112 = sphi 0, %s98
      %s116 = sphi 0, %s116
      %s118 = sphi 0, %s116
      %s119 = sphi 0, %s118
      %s133 = sphi 0, %s119
      %s139 = sphi 0, %s141
      %s142 = sphi 0, %s139
      %s143 = sphi 0, %s142
      %s159 = sphi 0, %s143
    $region4: #{tpu_custom_call.1} parent=1 // loop_header_branch
      %22 = sbr.rel (%p20) target = $region8
    $region5: #{tpu_custom_call.1} parent=1 // loop_body
      %s24 = ssub.s32 %s19, 1
      %s25 = ssub.s32 %s19, 2
      %s26 = sadd.s32 %s19, 1
      %s27 = ssub.s32 %s19, %s26
      %p28 = scmp.eq.s32.totalorder %s27, 0
      %s30 = sadd.s32 %s29, 1
      %s31 = scalar_select %p28, %s29, %s30
      %p34 = pneg %p28
      %p35 = scmp.eq.s32.totalorder %s19, 1
      %p36 = por %p34, %p35
      %p37 = scmp.ne.s32.totalorder %s29, %s32
      %p38 = scmp.eq.s32.totalorder %s19, 0
      %p39 = por %p37, %p38
      %p40 = scmp.ne.s32.totalorder %s29, %s32
      %p41 = scmp.eq.s32.totalorder %s24, 1
      %p42 = por %p40, %p41
      %p43 = scmp.ne.s32.totalorder %s32, %s33
      %p44 = scmp.eq.s32.totalorder %s24, 0
      %p45 = por %p43, %p44
      %p46 = scmp.ne.s32.totalorder %s32, %s33
      %p47 = scmp.eq.s32.totalorder %s25, 1
      %p48 = por %p46, %p47
      %p50 = scmp.ne.s32.totalorder %s33, %s49
      %p51 = scmp.eq.s32.totalorder %s25, 0
      %p52 = por %p50, %p51
      %s54 = sadd.s32 %s53, 1
      %p57 = scmp.eq.s32.totalorder %s19, 1
      %p58 = scmp.ne.s32.totalorder %s53, %s55
      %p59 = scmp.eq.s32.totalorder %s19, 0
      %p60 = por %p58, %p59
      %p61 = scmp.ne.s32.totalorder %s53, %s55
      %p62 = scmp.eq.s32.totalorder %s24, 1
      %p63 = por %p61, %p62
      %p64 = scmp.ne.s32.totalorder %s55, %s56
      %p65 = scmp.eq.s32.totalorder %s24, 0
      %p66 = por %p64, %p65
      %p67 = scmp.ne.s32.totalorder %s55, %s56
      %p68 = scmp.eq.s32.totalorder %s25, 1
      %p69 = por %p67, %p68
      %p71 = scmp.ne.s32.totalorder %s56, %s70
      %p72 = scmp.eq.s32.totalorder %s25, 0
      %p73 = por %p71, %p72
      %s75 = sadd.s32 %s74, 1
      %p78 = scmp.eq.s32.totalorder %s19, 1
      %p79 = scmp.ne.s32.totalorder %s74, %s76
      %p80 = scmp.eq.s32.totalorder %s19, 0
      %p81 = por %p79, %p80
      %p82 = scmp.ne.s32.totalorder %s74, %s76
      %p83 = scmp.eq.s32.totalorder %s24, 1
      %p84 = por %p82, %p83
      %p85 = scmp.ne.s32.totalorder %s76, %s77
      %p86 = scmp.eq.s32.totalorder %s24, 0
      %p87 = por %p85, %p86
      %p88 = scmp.ne.s32.totalorder %s76, %s77
      %p89 = scmp.eq.s32.totalorder %s25, 1
      %p90 = por %p88, %p89
      %p92 = scmp.ne.s32.totalorder %s77, %s91
      %p93 = scmp.eq.s32.totalorder %s25, 0
      %p94 = por %p92, %p93
      %s96 = sadd.s32 %s95, 1
      %p99 = scmp.eq.s32.totalorder %s19, 1
      %p100 = scmp.ne.s32.totalorder %s95, %s97
      %p101 = scmp.eq.s32.totalorder %s19, 0
      %p102 = por %p100, %p101
      %p103 = scmp.ne.s32.totalorder %s95, %s97
      %p104 = scmp.eq.s32.totalorder %s24, 1
      %p105 = por %p103, %p104
      %p106 = scmp.ne.s32.totalorder %s97, %s98
      %p107 = scmp.eq.s32.totalorder %s24, 0
      %p108 = por %p106, %p107
      %p109 = scmp.ne.s32.totalorder %s97, %s98
      %p110 = scmp.eq.s32.totalorder %s25, 1
      %p111 = por %p109, %p110
      %p113 = scmp.ne.s32.totalorder %s98, %s112
      %p114 = scmp.eq.s32.totalorder %s25, 0
      %p115 = por %p113, %p114
      %s117 = sadd.s32 %s116, 1
      %p120 = scmp.eq.s32.totalorder %s19, 1
      %p121 = scmp.ne.s32.totalorder %s116, %s118
      %p122 = scmp.eq.s32.totalorder %s19, 0
      %p123 = por %p121, %p122
      %p124 = scmp.ne.s32.totalorder %s116, %s118
      %p125 = scmp.eq.s32.totalorder %s24, 1
      %p126 = por %p124, %p125
      %p127 = scmp.ne.s32.totalorder %s118, %s119
      %p128 = scmp.eq.s32.totalorder %s24, 0
      %p129 = por %p127, %p128
      %p130 = scmp.ne.s32.totalorder %s118, %s119
      %p131 = scmp.eq.s32.totalorder %s25, 1
      %p132 = por %p130, %p131
      %p134 = scmp.ne.s32.totalorder %s119, %s133
      %p135 = scmp.eq.s32.totalorder %s25, 0
      %p136 = por %p134, %p135
      %s137 = ssub.s32 %s19, %s26
      %p138 = scmp.eq.s32.totalorder %s137, 0
      %s140 = sadd.s32 %s139, 1
      %s141 = scalar_select %p138, %s139, %s140
      %p144 = pneg %p138
      %p145 = scmp.eq.s32.totalorder %s19, 1
      %p146 = por %p144, %p145
      %p147 = scmp.ne.s32.totalorder %s139, %s142
      %p148 = scmp.eq.s32.totalorder %s19, 0
      %p149 = por %p147, %p148
      %p150 = scmp.ne.s32.totalorder %s139, %s142
      %p151 = scmp.eq.s32.totalorder %s24, 1
      %p152 = por %p150, %p151
      %p153 = scmp.ne.s32.totalorder %s142, %s143
      %p154 = scmp.eq.s32.totalorder %s24, 0
      %p155 = por %p153, %p154
      %p156 = scmp.ne.s32.totalorder %s142, %s143
      %p157 = scmp.eq.s32.totalorder %s25, 1
      %p158 = por %p156, %p157
      %p160 = scmp.ne.s32.totalorder %s143, %s159
      %p161 = scmp.eq.s32.totalorder %s25, 0
      %p162 = por %p160, %p161
      %p163 = scmp.le.s32.totalorder 1, %s19
      %p164 = scmp.lt.s32.totalorder %s19, 3
      %p165 = pnand %p163, %p164
      %p166 = pneg %p165
      // Predicated region
      $region9: #{tpu_custom_call.1} parent=5 // pred_check
        _
      $region10: #{tpu_custom_call.1} parent=5 // pred_check_branch
        %168 = sbr.rel (%p165) target = $region12
      $region11: #{tpu_custom_call.1} parent=5 // pred_region
        %s169 = ssub.s32 %s19, 1
        // Predicated region
        $region13: #{tpu_custom_call.1} parent=11 // pred_check
          %p170 = pneg %p66
        $region14: #{tpu_custom_call.1} parent=11 // pred_check_branch
          %172 = sbr.rel (%p170) target = $region16
        $region15: #{tpu_custom_call.1} parent=11 // pred_region
          %174 = vsyncadd [#allocation6], 0
          %s176 = sshll.u32 %s1, 4
          %s177 = int_to_ptr.hbm [resolvable:$true] %s176
          %s178 = sshll.u32 [#allocation5], 4
          %s179 = int_to_ptr.vmem [resolvable:$true] %s178
          %181 = dma.hbm_to_vmem [thread:$0]  %s177, 16, %s179, [#allocation6]
        $region16: #{tpu_custom_call.1} parent=11 // pred_fallthru
          _
        // Predicated region
        $region17: #{tpu_custom_call.1} parent=11 // pred_check
          %p182 = pneg %p87
        $region18: #{tpu_custom_call.1} parent=11 // pred_check_branch
          %184 = sbr.rel (%p182) target = $region20
        $region19: #{tpu_custom_call.1} parent=11 // pred_region
          %186 = vsyncadd [#allocation6], 0
          %s188 = sshll.u32 %s2, 4
          %s189 = int_to_ptr.hbm [resolvable:$true] %s188
          %s190 = sshll.u32 [#allocation7], 4
          %s191 = int_to_ptr.vmem [resolvable:$true] %s190
          %193 = dma.hbm_to_vmem [thread:$0]  %s189, 16, %s191, [#allocation6]
        $region20: #{tpu_custom_call.1} parent=11 // pred_fallthru
          _
        // Predicated region
        $region21: #{tpu_custom_call.1} parent=11 // pred_check
          %p194 = pneg %p108
        $region22: #{tpu_custom_call.1} parent=11 // pred_check_branch
          %196 = sbr.rel (%p194) target = $region24
        $region23: #{tpu_custom_call.1} parent=11 // pred_region
          %198 = vsyncadd [#allocation9], 0
          %s199 = sshll.u32 %s3, 4
          %s200 = int_to_ptr.hbm [resolvable:$true] %s199
          %s201 = sshll.u32 [#allocation8], 4
          %s202 = int_to_ptr.vmem [resolvable:$true] %s201
          %207 = dma.hbm_to_vmem [thread:$0]  %s200, 3072, %s202, [#allocation9], 192, 192, 12
        $region24: #{tpu_custom_call.1} parent=11 // pred_fallthru
          _
        // Predicated region
        $region25: #{tpu_custom_call.1} parent=11 // pred_check
          %p208 = pneg %p129
        $region26: #{tpu_custom_call.1} parent=11 // pred_check_branch
          %210 = sbr.rel (%p208) target = $region28
        $region27: #{tpu_custom_call.1} parent=11 // pred_region
          _
        $region28: #{tpu_custom_call.1} parent=11 // pred_fallthru
          _
      $region12: #{tpu_custom_call.1} parent=5 // pred_fallthru
        _
      %p211 = scmp.lt.s32.totalorder %s19, 2
      // Predicated region
      $region29: #{tpu_custom_call.1} parent=5 // pred_check
        %p212 = pneg %p211
      $region30: #{tpu_custom_call.1} parent=5 // pred_check_branch
        %214 = sbr.rel (%p212) target = $region32
      $region31: #{tpu_custom_call.1} parent=5 // pred_region
        // Predicated region
        $region33: #{tpu_custom_call.1} parent=31 // pred_check
          %p215 = pneg %p39
        $region34: #{tpu_custom_call.1} parent=31 // pred_check_branch
          %217 = sbr.rel (%p215) target = $region36
        $region35: #{tpu_custom_call.1} parent=31 // pred_region
          %s218 = sand.u32 %s29, 1
          %s219 = scalar_lea.sflag [#allocation3], %s218
          %s220 = sand.u32 %s29, 1
          %s221 = smul.addr %s220, 8
          %s222 = scalar_lea.vmem [#allocation2], %s221
          %224 = vsyncadd %s219, 0
          %s225 = smul.addr %s19, 8
          %s226 = scalar_lea.hbm %s0, %s225
          %s228 = sshll.u32 %s226, 4
          %s229 = int_to_ptr.hbm [resolvable:$true] %s228
          %s230 = sshll.u32 %s222, 4
          %s231 = int_to_ptr.vmem [resolvable:$true] %s230
          %233 = dma.hbm_to_vmem [thread:$0]  %s229, 128, %s231, %s219
        $region36: #{tpu_custom_call.1} parent=31 // pred_fallthru
          _
      $region32: #{tpu_custom_call.1} parent=5 // pred_fallthru
        _
      %p234 = scmp.le.s32.totalorder 1, %s19
      %p235 = scmp.lt.s32.totalorder %s19, 3
      %p236 = pnand %p234, %p235
      %p237 = pneg %p236
      // Predicated region
      $region37: #{tpu_custom_call.1} parent=5 // pred_check
        _
      $region38: #{tpu_custom_call.1} parent=5 // pred_check_branch
        %239 = sbr.rel (%p236) target = $region40
      $region39: #{tpu_custom_call.1} parent=5 // pred_region
        %s240 = ssub.s32 %s19, 1
        %s241 = sand.u32 %s32, 1
        %s242 = scalar_lea.sflag [#allocation3], %s241
        %s243 = sand.u32 %s32, 1
        %s244 = smul.addr %s243, 8
        %s245 = scalar_lea.vmem [#allocation2], %s244
        // Predicated region
        $region41: #{tpu_custom_call.1} parent=39 // pred_check
          %p246 = pneg %p45
        $region42: #{tpu_custom_call.1} parent=39 // pred_check_branch
          %248 = sbr.rel (%p246) target = $region44
        $region43: #{tpu_custom_call.1} parent=39 // pred_region
          %250 = dma.done %s242, 128
        $region44: #{tpu_custom_call.1} parent=39 // pred_fallthru
          _
        // Predicated region
        $region45: #{tpu_custom_call.1} parent=39 // pred_check
          %p251 = pneg %p66
        $region46: #{tpu_custom_call.1} parent=39 // pred_check_branch
          %253 = sbr.rel (%p251) target = $region48
        $region47: #{tpu_custom_call.1} parent=39 // pred_region
          %255 = dma.done [#allocation6], 16
        $region48: #{tpu_custom_call.1} parent=39 // pred_fallthru
          _
        // Predicated region
        $region49: #{tpu_custom_call.1} parent=39 // pred_check
          %p256 = pneg %p87
        $region50: #{tpu_custom_call.1} parent=39 // pred_check_branch
          %258 = sbr.rel (%p256) target = $region52
        $region51: #{tpu_custom_call.1} parent=39 // pred_region
          %260 = dma.done [#allocation6], 16
        $region52: #{tpu_custom_call.1} parent=39 // pred_fallthru
          _
        // Predicated region
        $region53: #{tpu_custom_call.1} parent=39 // pred_check
          %p261 = pneg %p108
        $region54: #{tpu_custom_call.1} parent=39 // pred_check_branch
          %263 = sbr.rel (%p261) target = $region56
        $region55: #{tpu_custom_call.1} parent=39 // pred_region
          %265 = dma.done [#allocation9], 3072
        $region56: #{tpu_custom_call.1} parent=39 // pred_fallthru
          _
        %s266 = sand.u32 %s32, 1
        %s267 = scalar_lea.sflag [#allocation3], %s266
        %s268 = sand.u32 %s32, 1
        %s269 = smul.addr %s268, 8
        %s270 = scalar_lea.vmem [#allocation2], %s269
        %p271 = pneg %p45
        %p272 = pneg %p42
        %p273 = pneg %p66
        %p274 = pneg %p63
        %p275 = pneg %p87
        %p276 = pneg %p84
        %p277 = pneg %p108
        %p278 = pneg %p105
        %p279 = pneg %p129
        %p280 = pneg %p126
        %p281 = pneg %p155
        %p282 = pneg %p152
        %s283 = sand.u32 %s142, 1
        %s284 = scalar_lea.sflag [#allocation4], %s283
        %s285 = sand.u32 %s142, 1
        %s286 = smul.addr %s285, 24
        %s287 = scalar_lea.vmem [#allocation10], %s286
        %v288 = vld [vmem:[%s245] sm:$0xff]
        %289 = vadd.xlane.f32.xlu0 %v288
        %v290 = vpop.xlane.xlu0 %289
        %v291 = vrcp.pop 128.0
        %v292 = vmul.f32 128.0, %v291
        %v293 = vsub.f32 1.0, %v292
        %v294 = vmul.f32 %v291, %v293
        %v295 = vadd.f32 %v291, %v294
        %vm296 = vweird.f32 %v291
        %v297 = vsel %vm296, %v291, %v295
        %v298 = vmul.f32 %v290, %v297
        %v299 = vsub.f32 %v288, %v298
        %v300 = vmul.f32 %v299, %v299
        %301 = vadd.xlane.f32.xlu0 %v300
        %v302 = vpop.xlane.xlu0 %301
        %v303 = vmul.f32 %v302, 0.007874016
        %v304 = vld [vmem:[#allocation5] sm:$0x1]
        %v306 = vperm.slane %v304, 0
        %v308 = vmul.f32 %v306, %v299
        %v309 = vrsqrt.pop %v303
        %v310 = vmul.f32 %v309, %v303
        %v311 = vmul.f32 %v310, %v309
        %v312 = vmul.f32 0.5, %v311
        %v313 = vsub.f32 1.5, %v312
        %v314 = vmul.f32 %v309, %v313
        %v315 = vmul.f32 %v303, %v314
        %vm316 = vcmp.eq.f32.partialorder %v303, inf
        %v317 = vsel %vm316, %v303, %v315
        %vm318 = vcmp.eq.f32.partialorder %v303, 0.0
        %v319 = vand.u32 %v303, 2147483648
        %v320 = vsel %vm318, %v319, %v317
        %v321 = vadd.f32 %v320, 1e-06
        %v322 = vrcp.pop %v321
        %v323 = vmul.f32 %v321, %v322
        %v324 = vsub.f32 1.0, %v323
        %v325 = vmul.f32 %v322, %v324
        %v326 = vadd.f32 %v322, %v325
        %vm327 = vweird.f32 %v321
        %vm328 = vweird.f32 %v322
        %vm329 = vmor %vm327, %vm328
        %v330 = vsel %vm329, %v322, %v326
        %v331 = vand.u32 2147483647, %v321
        %vm332 = vcmp.eq.f32.partialorder %v331, 8.507059e+37
        %v333 = vand.u32 %v321, 2147483648
        %v334 = vor.u32 1.1754944e-38, %v333
        %v335 = vsel %vm332, %v334, %v330
        %v336 = vmul.f32 %v308, %v335
        %v337 = vld [vmem:[#allocation7] sm:$0x1]
        %v339 = vperm.slane %v337, 0
        %v341 = vadd.f32 %v336, %v339
        %v342 = vpack.c.bf16 %v341, %v341
        %v343 = vld [vmem:[#allocation8] sm:$0xff]
        %v344 = vld [vmem:[#allocation8 + $0x8] sm:$0xf]
        %v345 = vld [vmem:[#allocation8 + $0xc] sm:$0xff]
        %v346 = vld [vmem:[#allocation8 + $0x14] sm:$0xf]
        %v347 = vld [vmem:[#allocation8 + $0x18] sm:$0xff]
        %v348 = vld [vmem:[#allocation8 + $0x20] sm:$0xf]
        %v349 = vld [vmem:[#allocation8 + $0x24] sm:$0xff]
        %v350 = vld [vmem:[#allocation8 + $0x2c] sm:$0xf]
        %v351 = vld [vmem:[#allocation8 + $0x30] sm:$0xff]
        %v352 = vld [vmem:[#allocation8 + $0x38] sm:$0xf]
        %v353 = vld [vmem:[#allocation8 + $0x3c] sm:$0xff]
        %v354 = vld [vmem:[#allocation8 + $0x44] sm:$0xf]
        %v355 = vld [vmem:[#allocation8 + $0x48] sm:$0xff]
        %v356 = vld [vmem:[#allocation8 + $0x50] sm:$0xf]
        %v357 = vld [vmem:[#allocation8 + $0x54] sm:$0xff]
        %v358 = vld [vmem:[#allocation8 + $0x5c] sm:$0xf]
        %v359 = vld [vmem:[#allocation8 + $0x60] sm:$0xff]
        %v360 = vld [vmem:[#allocation8 + $0x68] sm:$0xf]
        %v361 = vld [vmem:[#allocation8 + $0x6c] sm:$0xff]
        %v362 = vld [vmem:[#allocation8 + $0x74] sm:$0xf]
        %v363 = vld [vmem:[#allocation8 + $0x78] sm:$0xff]
        %v364 = vld [vmem:[#allocation8 + $0x80] sm:$0xf]
        %v365 = vld [vmem:[#allocation8 + $0x84] sm:$0xff]
        %v366 = vld [vmem:[#allocation8 + $0x8c] sm:$0xf]
        %v367 = vld [vmem:[#allocation8 + $0x90] sm:$0xff]
        %v368 = vld [vmem:[#allocation8 + $0x98] sm:$0xf]
        %v369 = vld [vmem:[#allocation8 + $0x9c] sm:$0xff]
        %v370 = vld [vmem:[#allocation8 + $0xa4] sm:$0xf]
        %v371 = vld [vmem:[#allocation8 + $0xa8] sm:$0xff]
        %v372 = vld [vmem:[#allocation8 + $0xb0] sm:$0xf]
        %v373 = vld [vmem:[#allocation8 + $0xb4] sm:$0xff]
        %v374 = vld [vmem:[#allocation8 + $0xbc] sm:$0xf]
        %v375 = vld [vmem:[%s4] sm:$0x7]
        %v377 = vperm.slane %v375, 0
        %v378 = vperm.slane %v375, 1
        %v379 = vperm.slane %v375, 2
        %v415 = vunpack.c.l.b16 %v343
        %v416 = vunpack.c.h.b16 %v343
        %v417 = vunpack.c.l.b16 %v344
        %v418 = vunpack.c.l.b16 %v345
        %v419 = vunpack.c.h.b16 %v345
        %v420 = vunpack.c.l.b16 %v346
        %v421 = vunpack.c.l.b16 %v347
        %v422 = vunpack.c.h.b16 %v347
        %v423 = vunpack.c.l.b16 %v348
        %v424 = vunpack.c.l.b16 %v349
        %v425 = vunpack.c.h.b16 %v349
        %v426 = vunpack.c.l.b16 %v350
        %v427 = vunpack.c.l.b16 %v351
        %v428 = vunpack.c.h.b16 %v351
        %v429 = vunpack.c.l.b16 %v352
        %v430 = vunpack.c.l.b16 %v353
        %v431 = vunpack.c.h.b16 %v353
        %v432 = vunpack.c.l.b16 %v354
        %v433 = vunpack.c.l.b16 %v355
        %v434 = vunpack.c.h.b16 %v355
        %v435 = vunpack.c.l.b16 %v356
        %v436 = vunpack.c.l.b16 %v357
        %v437 = vunpack.c.h.b16 %v357
        %v438 = vunpack.c.l.b16 %v358
        %v439 = vunpack.c.l.b16 %v359
        %v440 = vunpack.c.h.b16 %v359
        %v441 = vunpack.c.l.b16 %v360
        %v442 = vunpack.c.l.b16 %v361
        %v443 = vunpack.c.h.b16 %v361
        %v444 = vunpack.c.l.b16 %v362
        %v445 = vunpack.c.l.b16 %v363
        %v446 = vunpack.c.h.b16 %v363
        %v447 = vunpack.c.l.b16 %v364
        %v448 = vunpack.c.l.b16 %v365
        %v449 = vunpack.c.h.b16 %v365
        %v450 = vunpack.c.l.b16 %v366
        %v451 = vunpack.c.l.b16 %v367
        %v452 = vunpack.c.h.b16 %v367
        %v453 = vunpack.c.l.b16 %v368
        %v454 = vunpack.c.l.b16 %v369
        %v455 = vunpack.c.h.b16 %v369
        %v456 = vunpack.c.l.b16 %v370
        %v457 = vunpack.c.l.b16 %v371
        %v458 = vunpack.c.h.b16 %v371
        %v459 = vunpack.c.l.b16 %v372
        %v460 = vunpack.c.l.b16 %v373
        %v461 = vunpack.c.h.b16 %v373
        %v462 = vunpack.c.l.b16 %v374
        %v463 = vpack.c.b16 %v418, %v415
        %v464 = vpack.c.b16 %v419, %v416
        %v465 = vpack.c.b16 %v420, %v417
        %v466 = vpack.c.b16 %v424, %v421
        %v467 = vpack.c.b16 %v425, %v422
        %v468 = vpack.c.b16 %v426, %v423
        %v469 = vpack.c.b16 %v430, %v427
        %v470 = vpack.c.b16 %v431, %v428
        %v471 = vpack.c.b16 %v432, %v429
        %v472 = vpack.c.b16 %v436, %v433
        %v473 = vpack.c.b16 %v437, %v434
        %v474 = vpack.c.b16 %v438, %v435
        %v475 = vpack.c.b16 %v442, %v439
        %v476 = vpack.c.b16 %v443, %v440
        %v477 = vpack.c.b16 %v444, %v441
        %v478 = vpack.c.b16 %v448, %v445
        %v479 = vpack.c.b16 %v449, %v446
        %v480 = vpack.c.b16 %v450, %v447
        %v481 = vpack.c.b16 %v454, %v451
        %v482 = vpack.c.b16 %v455, %v452
        %v483 = vpack.c.b16 %v456, %v453
        %v484 = vpack.c.b16 %v460, %v457
        %v485 = vpack.c.b16 %v461, %v458
        %v486 = vpack.c.b16 %v462, %v459
        %511 = vmatpush.bf16.msra.mxu0 %v484
        %512 = vmatpush.bf16.msra.mxu0 %v481
        %513 = vmatpush.bf16.msra.mxu0 %v478
        %514 = vmatpush.bf16.msra.mxu0 %v475
        %515 = vmatpush.bf16.msra.mxu0 %v472
        %516 = vmatpush.bf16.msra.mxu0 %v469
        %517 = vmatpush.bf16.msra.mxu0 %v466
        %518 = vmatpush.bf16.msra.mxu0 %v463
        %519 = vmatmul.bf16.gmra.mxu0 %v342
        %v520 = vpop.f32.mrf.mxu0
        %v521 = vadd.f32 %v377, %v520
        %v522 = vpop.f32.mrf.mxu0
        %523 = vdwg.mxu0
        %524 = vmatpush.bf16.msra.mxu0 %v485
        %525 = vmatpush.bf16.msra.mxu0 %v482
        %526 = vmatpush.bf16.msra.mxu0 %v479
        %527 = vmatpush.bf16.msra.mxu0 %v476
        %528 = vmatpush.bf16.msra.mxu0 %v473
        %529 = vmatpush.bf16.msra.mxu0 %v470
        %530 = vmatpush.bf16.msra.mxu0 %v467
        %531 = vmatpush.bf16.msra.mxu0 %v464
        %532 = vmatmul.bf16.gmra.mxu0 %v342
        %v533 = vpop.f32.mrf.mxu0
        %v534 = vadd.f32 %v378, %v533
        %v535 = vpop.f32.mrf.mxu0
        %536 = vdwg.mxu0
        %537 = vmatpush.bf16.msra.mxu0 %v486
        %538 = vmatpush.bf16.msra.mxu0 %v483
        %539 = vmatpush.bf16.msra.mxu0 %v480
        %540 = vmatpush.bf16.msra.mxu0 %v477
        %541 = vmatpush.bf16.msra.mxu0 %v474
        %542 = vmatpush.bf16.msra.mxu0 %v471
        %543 = vmatpush.bf16.msra.mxu0 %v468
        %544 = vmatpush.bf16.msra.mxu0 %v465
        %545 = vmatmul.bf16.gmra.mxu0 %v342
        %v546 = vpop.f32.mrf.mxu0
        %v547 = vadd.f32 %v379, %v546
        %v548 = vpop.f32.mrf.mxu0
        %549 = vdwg.mxu0
        %550 = vst [vmem:[%s287] sm:$0xff] %v521
        %551 = vst [vmem:[%s287 + $0x8] sm:$0xff] %v534
        %552 = vst [vmem:[%s287 + $0x10] sm:$0xff] %v547
        %s553 = sand.u32 %s142, 1
        %s554 = scalar_lea.sflag [#allocation4], %s553
        %s555 = sand.u32 %s142, 1
        %s556 = smul.addr %s555, 24
        %s557 = scalar_lea.vmem [#allocation10], %s556
        // Predicated region
        $region57: #{tpu_custom_call.1} parent=39 // pred_check
          %p558 = pneg %p152
        $region58: #{tpu_custom_call.1} parent=39 // pred_check_branch
          %560 = sbr.rel (%p558) target = $region60
        $region59: #{tpu_custom_call.1} parent=39 // pred_region
          %562 = vsyncadd %s554, 0
          %s563 = smul.addr %s24, 3
          %s564 = smul.addr %s563, 8
          %s565 = scalar_lea.hbm %s5, %s564
          %s567 = sshll.u32 %s557, 4
          %s568 = int_to_ptr.vmem [resolvable:$true] %s567
          %s569 = sshll.u32 %s565, 4
          %s570 = int_to_ptr.hbm [resolvable:$true] %s569
          %572 = dma.vmem_to_hbm [thread:$0]  %s568, 384, %s570, %s554
        $region60: #{tpu_custom_call.1} parent=39 // pred_fallthru
          _
      $region40: #{tpu_custom_call.1} parent=5 // pred_fallthru
        _
      %p573 = scmp.le.s32.totalorder 2, %s19
      // Predicated region
      $region61: #{tpu_custom_call.1} parent=5 // pred_check
        %p574 = pneg %p573
      $region62: #{tpu_custom_call.1} parent=5 // pred_check_branch
        %576 = sbr.rel (%p574) target = $region64
      $region63: #{tpu_custom_call.1} parent=5 // pred_region
        %s577 = ssub.s32 %s19, 2
        // Predicated region
        $region65: #{tpu_custom_call.1} parent=63 // pred_check
          %p578 = pneg %p158
        $region66: #{tpu_custom_call.1} parent=63 // pred_check_branch
          %580 = sbr.rel (%p578) target = $region68
        $region67: #{tpu_custom_call.1} parent=63 // pred_region
          %s581 = sand.u32 %s143, 1
          %s582 = scalar_lea.sflag [#allocation4], %s581
          %s583 = sand.u32 %s143, 1
          %s584 = smul.addr %s583, 24
          %s585 = scalar_lea.vmem [#allocation10], %s584
          %587 = dma.done %s582, 384
        $region68: #{tpu_custom_call.1} parent=63 // pred_fallthru
          _
      $region64: #{tpu_custom_call.1} parent=5 // pred_fallthru
        _
    $region6: #{tpu_custom_call.1} parent=1 // loop_footer
      %s23 = sadd.s32 1, %s19
    $region7: #{tpu_custom_call.1} parent=1 // loop_footer_branch
      %18 = sbr.rel target = $region3
    $region8: #{tpu_custom_call.1} parent=1 // loop_exit
      _
    %588 = vsyncpa [#allocation3], 1
    %s589 = scalar_lea.sflag [#allocation3], 1
    %590 = vsyncpa %s589, 1
    %591 = vsyncpa [#allocation6], 1
    %592 = vsyncpa [#allocation9], 1
    %593 = vsyncpa [#allocation4], 1
    %s594 = scalar_lea.sflag [#allocation4], 1
    %595 = vsyncpa %s594, 1

</llo_original>
